<compile_context>
chip_gen: v7x
topology: tpu7x:2x2x1
jax: 0.10.0
libtpu: 0.0.40
codegen_flags: <defaults>
</compile_context>

<pallas_src>
import jax
import jax.numpy as jnp
from jax.experimental import pallas as pl
from jax.experimental.pallas import tpu as pltpu


# ----------------------------------------------------------------------------
# Small helpers
# ----------------------------------------------------------------------------
def _cdiv(a, b):
    return (a + b - 1) // b


def _round_up(x, m):
    return _cdiv(x, m) * m


def _sublane_granule(dtype):
    # 8 rows for f32, 16 for bf16, 32 for int8/fp8 (sublane packing).
    return max(8, 32 // jnp.dtype(dtype).itemsize)


def _vmem_capacity_bytes():
    """Generation-aware VMEM capacity (v5e/v6e: 128 MiB, v7x: 64 MiB)."""
    try:
        info = pltpu.get_tpu_info()
        cap = getattr(info, "vmem_capacity_bytes", None)
        if cap:
            return int(cap)
    except Exception:
        pass
    return 64 * 1024 * 1024  # conservative fallback (v7x per-TC VMEM)


def _pick_tile(dim, pref, granule):
    """Pick a tile size <= pref that avoids padding whenever possible.

    - dim <= pref          -> one block covering the full dim (always legal,
                              and means that operand streams from HBM once).
    - a granule-aligned divisor of dim exists -> use it (no padding).
    - otherwise            -> minimal-padding tile (pad handled by caller).
    """
    if dim <= pref:
        return dim
    t = (pref // granule) * granule
    while t >= granule:
        if dim % t == 0:
            return t
        t -= granule
    n_blocks = _cdiv(dim, pref)
    return _round_up(_cdiv(dim, n_blocks), granule)


# ----------------------------------------------------------------------------
# Kernels
# ----------------------------------------------------------------------------
def _linear_kernel_bias(x_ref, w_ref, b_ref, o_ref, acc_ref):
    # x_ref  : (tm, tk)   activation tile (compute dtype, e.g. bf16)
    # w_ref  : (tk, tn)   weight tile, already in [K, N] layout -> MXU canonical
    # b_ref  : (1,  tn)   f32 bias tile (index_map independent of K)
    # o_ref  : (tm, tn)   output tile (original input dtype)
    # acc_ref: (tm, tn)   f32 accumulator, resident in VMEM across the K axis
    k = pl.program_id(2)

    @pl.when(k == 0)
    def _init():
        acc_ref[...] = jnp.zeros_like(acc_ref)

    acc_ref[...] += jnp.dot(x_ref[...], w_ref[...],
                            preferred_element_type=jnp.float32)

    @pl.when(k == pl.num_programs(2) - 1)
    def _finalize():
        o_ref[...] = (acc_ref[...] + b_ref[...]).astype(o_ref.dtype)


def _linear_kernel_nobias(x_ref, w_ref, o_ref, acc_ref):
    k = pl.program_id(2)

    @pl.when(k == 0)
    def _init():
        acc_ref[...] = jnp.zeros_like(acc_ref)

    acc_ref[...] += jnp.dot(x_ref[...], w_ref[...],
                            preferred_element_type=jnp.float32)

    @pl.when(k == pl.num_programs(2) - 1)
    def _finalize():
        o_ref[...] = acc_ref[...].astype(o_ref.dtype)


# ----------------------------------------------------------------------------
# Wrapper
# ----------------------------------------------------------------------------
def linear_pallas(x, weight, bias=None, *,
                  weight_is_transposed=False,
                  compute_dtype=jnp.bfloat16,
                  tm=None, tn=None, tk=None,
                  vmem_limit_bytes=None):
    """nn.Linear forward: y = x @ W.T + b.

    x:      (..., d_in)
    weight: (d_out, d_in) PyTorch layout, or (d_in, d_out) if
            weight_is_transposed=True (preferred for repeated calls).
    bias:   (d_out,) or None
    compute_dtype: dtype fed to the MXU (bf16 default; f32 for exact semantics).
                   Accumulation and bias add are always f32.
    """
    orig_shape = x.shape
    d_in = orig_shape[-1]
    x2 = x.reshape(-1, d_in)
    M = x2.shape[0]

    if weight_is_transposed:
        d_in_w, d_out = weight.shape
        w = weight
    else:
        d_out, d_in_w = weight.shape
        # One-time layout fix (fused with the cast below by XLA). Keep weights
        # pre-transposed / pre-cast in real deployments to amortize this.
        w = weight.T
    assert d_in == d_in_w, "weight / input shape mismatch"

    compute_dtype = jnp.dtype(compute_dtype)
    out_dtype = x.dtype
    in_size = compute_dtype.itemsize
    out_size = jnp.dtype(out_dtype).itemsize

    x2 = x2.astype(compute_dtype)
    w = w.astype(compute_dtype)

    has_bias = bias is not None
    if has_bias:
        b = bias.astype(jnp.float32).reshape(1, d_out)

    # ---- generation-aware VMEM budget --------------------------------------
    vmem_cap = _vmem_capacity_bytes()
    if vmem_limit_bytes is None:
        # ~96 MiB on the 128 MiB parts (v5e/v6e), ~48 MiB on v7x (64 MiB VMEM).
        vmem_limit_bytes = int(vmem_cap * 0.75)
    budget = int(vmem_limit_bytes * 0.9)  # headroom for compiler internals

    m_gran = _sublane_granule(compute_dtype)

    # ---- tile preferences (large tiles => few HBM re-reads of x / W) -------
    if tm is None:
        tm = 512
    if tn is None:
        tn = 1024 if in_size <= 2 else 512
    if tk is None:
        tk = 2048 if in_size <= 2 else 1024
    tm_pref, tn_pref, tk_pref = int(tm), int(tn), int(tk)

    def working_set(btm, btn, btk):
        ws = 2 * btm * btk * in_size          # x tile, double-buffered
        ws += 2 * btk * btn * in_size         # W tile, double-buffered
        ws += 2 * btm * btn * out_size        # output tile, double-buffered
        ws += btm * btn * 4                   # f32 accumulator scratch
        if has_bias:
            ws += 2 * btn * 4
        return ws

    btm = btn = btk = None
    for _ in range(32):
        btm = _pick_tile(M, tm_pref, m_gran)
        btn = _pick_tile(d_out, tn_pref, 128)
        btk = _pick_tile(d_in, tk_pref, 128)
        if working_set(btm, btn, btk) <= budget:
            break
        if tk_pref > 256:
            tk_pref //= 2
        elif tm_pref > 2 * m_gran:
            tm_pref //= 2
        elif tn_pref > 256:
            tn_pref //= 2
        else:
            break

    Mp = _round_up(M, btm)
    Np = _round_up(d_out, btn)
    Kp = _round_up(d_in, btk)

    # ---- pad only when actually required (aligned shapes: zero-copy) -------
    xp = x2 if (Mp == M and Kp == d_in) else jnp.pad(
        x2, ((0, Mp - M), (0, Kp - d_in)))
    wp = w if (Kp == d_in and Np == d_out) else jnp.pad(
        w, ((0, Kp - d_in), (0, Np - d_out)))
    if has_bias:
        bp = b if Np == d_out else jnp.pad(b, ((0, 0), (0, Np - d_out)))

    gm, gn, gk = Mp // btm, Np // btn, Kp // btk
    grid = (gm, gn, gk)  # reduction (K) axis trailing

    # Megacore split: prefer N (each core streams half of W); M only if N
    # cannot be split; K always "arbitrary" (accumulator carried across it).
    if gn > 1:
        dims = ("arbitrary", "parallel", "arbitrary")
    elif gm > 1:
        dims = ("parallel", "arbitrary", "arbitrary")
    else:
        dims = ("arbitrary", "arbitrary", "arbitrary")

    flops = 2 * M * d_in * d_out
    bytes_accessed = (xp.size * in_size * gn        # x re-read per N block
                      + wp.size * in_size * gm      # W re-read per M block
                      + Mp * Np * out_size)         # output written once
    if has_bias:
        bytes_accessed += Np * 4 * gm

    in_specs = [
        pl.BlockSpec((btm, btk), lambda i, j, k: (i, k)),   # x  [M, K]
        pl.BlockSpec((btk, btn), lambda i, j, k: (k, j)),   # Wt [K, N]
    ]
    args = [xp, wp]
    if has_bias:
        in_specs.append(pl.BlockSpec((1, btn), lambda i, j, k: (0, j)))
        args.append(bp)
    kernel = _linear_kernel_bias if has_bias else _linear_kernel_nobias

    out = pl.pallas_call(
        kernel,
        out_shape=jax.ShapeDtypeStruct((Mp, Np), out_dtype),
        grid_spec=pltpu.PrefetchScalarGridSpec(
            num_scalar_prefetch=0,
            grid=grid,
            in_specs=in_specs,
            out_specs=pl.BlockSpec((btm, btn), lambda i, j, k: (i, j)),
            scratch_shapes=[pltpu.VMEM((btm, btn), jnp.float32)],
        ),
        compiler_params=pltpu.CompilerParams(
            dimension_semantics=dims,
            vmem_limit_bytes=int(vmem_limit_bytes),
        ),
        cost_estimate=pl.CostEstimate(
            flops=flops, transcendentals=0, bytes_accessed=bytes_accessed),
    )(*args)

    if Mp != M or Np != d_out:
        out = out[:M, :d_out]
    return out.reshape(orig_shape[:-1] + (d_out,))


# ----------------------------------------------------------------------------
# Parameter init mirroring the module's __init__
# ----------------------------------------------------------------------------
def init_linear_params(key, d_in, d_out):
    """weight: xavier normal; bias: nn.Linear default uniform(-1/sqrt(d_in), ...)."""
    kw, kb = jax.random.split(key)
    std = (2.0 / (d_in + d_out)) ** 0.5
    weight = std * jax.random.normal(kw, (d_out, d_in), dtype=jnp.float32)
    bound = 1.0 / (d_in ** 0.5)
    bias = jax.random.uniform(kb, (d_out,), minval=-bound, maxval=bound,
                              dtype=jnp.float32)
    return weight, bias


if __name__ == "__main__":
    key = jax.random.PRNGKey(0)
    k1, k2, k3, k4, k5, k6 = jax.random.split(key, 6)

    # --- Test 1: small module-default shapes, bf16 MXU path -----------------
    d_in, d_out, batch = 32, 16, 8
    x = jax.random.normal(k1, (batch, d_in), dtype=jnp.float32)
    w, b = init_linear_params(k2, d_in, d_out)
    y = linear_pallas(x, w, b)
    jax.block_until_ready(y)
    xb = x.astype(jnp.bfloat16).astype(jnp.float32)
    wb = w.astype(jnp.bfloat16).astype(jnp.float32)
    y_ref = xb @ wb.T + b
    assert y.shape == (batch, d_out)
    assert jnp.allclose(y, y_ref, atol=1e-3, rtol=1e-3)

    # --- Test 2: multi-tile grid (K accumulation + N-parallel), exact f32 ---
    d_in2, d_out2, batch2 = 256, 384, 16
    x2 = jax.random.normal(k3, (batch2, d_in2), dtype=jnp.float32)
    w2, b2 = init_linear_params(k4, d_in2, d_out2)
    y2 = linear_pallas(x2, w2, b2, compute_dtype=jnp.float32,
                       tm=16, tn=128, tk=128)
    jax.block_until_ready(y2)
    y2_ref = x2 @ w2.T + b2
    assert jnp.allclose(y2, y2_ref, atol=1e-4, rtol=1e-4)

    # --- Test 3: unaligned shapes -> padding fallback, no bias, bf16 path ---
    d_in3, d_out3, batch3 = 300, 200, 20
    x3 = jax.random.normal(k5, (batch3, d_in3), dtype=jnp.float32)
    w3, _ = init_linear_params(k6, d_in3, d_out3)
    y3 = linear_pallas(x3, w3, None, tm=16, tn=128, tk=128)
    jax.block_until_ready(y3)
    x3b = x3.astype(jnp.bfloat16).astype(jnp.float32)
    w3b = w3.astype(jnp.bfloat16).astype(jnp.float32)
    y3_ref = x3b @ w3b.T
    assert jnp.allclose(y3, y3_ref, atol=1e-3, rtol=1e-3)

    print("KERNEL_OK")
</pallas_src>

<mosaic_0001>
module attributes {stable_mosaic.version = 11 : i64} {
  func.func @_linear_kernel_bias(%arg0: i32, %arg1: i32, %arg2: i32, %arg3: memref<8x32xbf16, #tpu.memory_space<vmem>>, %arg4: memref<32x16xbf16, #tpu.memory_space<vmem>>, %arg5: memref<1x16xf32, #tpu.memory_space<vmem>>, %arg6: memref<8x16xf32, #tpu.memory_space<vmem>>, %arg7: memref<8x16xf32, #tpu.memory_space<vmem>>) attributes {dimension_semantics = [#tpu.dimension_semantics<arbitrary>, #tpu.dimension_semantics<arbitrary>, #tpu.dimension_semantics<arbitrary>], iteration_bounds = array<i64: 1, 1, 1>, scalar_prefetch = 0 : i64, scratch_operands = 1 : i64, tpu.core_type = #tpu.core_type<tc>, window_params = [{transform_indices = @transform_0, window_bounds = array<i64: 8, 32>}, {transform_indices = @transform_1, window_bounds = array<i64: 32, 16>}, {transform_indices = @transform_2, window_bounds = array<i64: 1, 16>}, {transform_indices = @transform_3, window_bounds = array<i64: 8, 16>}]} {
    %c0_i32 = arith.constant 0 : i32
    %0 = arith.cmpi eq, %arg2, %c0_i32 : i32
    %1 = arith.extui %0 : i1 to i32
    %c0_i32_0 = arith.constant 0 : i32
    %2 = arith.cmpi ne, %1, %c0_i32_0 : i32
    scf.if %2 {
      %cst_10 = arith.constant 0.000000e+00 : f32
      %12 = vector.broadcast %cst_10 : f32 to vector<8x16xf32>
      %c0_11 = arith.constant 0 : index
      %c0_12 = arith.constant 0 : index
      %13 = vector.load %arg7[%c0_11, %c0_12] : memref<8x16xf32, #tpu.memory_space<vmem>>, vector<8x16xf32>
      tpu.vector_store %arg7[%c0_11, %c0_12], %12 {strides = array<i32>} : memref<8x16xf32, #tpu.memory_space<vmem>>, vector<8x16xf32>,
    } else {
    }
    %c0 = arith.constant 0 : index
    %c0_1 = arith.constant 0 : index
    %3 = vector.load %arg7[%c0, %c0_1] : memref<8x16xf32, #tpu.memory_space<vmem>>, vector<8x16xf32>
    %c0_2 = arith.constant 0 : index
    %c0_3 = arith.constant 0 : index
    %4 = vector.load %arg3[%c0_2, %c0_3] : memref<8x32xbf16, #tpu.memory_space<vmem>>, vector<8x32xbf16>
    %c0_4 = arith.constant 0 : index
    %c0_5 = arith.constant 0 : index
    %5 = vector.load %arg4[%c0_4, %c0_5] : memref<32x16xbf16, #tpu.memory_space<vmem>>, vector<32x16xbf16>
    %cst = arith.constant dense<0.000000e+00> : vector<8x16xf32>
    %6 = tpu.matmul %4, %5, %cst {dimension_numbers = #tpu.dot_dimension_numbers<[1], [0], [0], [1], [0, 0, 1, 1], [], []>} : vector<8x32xbf16>, vector<32x16xbf16>, vector<8x16xf32> -> vector<8x16xf32>
    %7 = arith.addf %3, %6 : vector<8x16xf32>
    %c0_6 = arith.constant 0 : index
    %c0_7 = arith.constant 0 : index
    %8 = vector.load %arg7[%c0_6, %c0_7] : memref<8x16xf32, #tpu.memory_space<vmem>>, vector<8x16xf32>
    tpu.vector_store %arg7[%c0_6, %c0_7], %7 {strides = array<i32>} : memref<8x16xf32, #tpu.memory_space<vmem>>, vector<8x16xf32>,
    %c0_i32_8 = arith.constant 0 : i32
    %9 = arith.cmpi eq, %arg2, %c0_i32_8 : i32
    %10 = arith.extui %9 : i1 to i32
    %c0_i32_9 = arith.constant 0 : i32
    %11 = arith.cmpi ne, %10, %c0_i32_9 : i32
    scf.if %11 {
      %c0_10 = arith.constant 0 : index
      %c0_11 = arith.constant 0 : index
      %12 = vector.load %arg7[%c0_10, %c0_11] : memref<8x16xf32, #tpu.memory_space<vmem>>, vector<8x16xf32>
      %c0_12 = arith.constant 0 : index
      %c0_13 = arith.constant 0 : index
      %13 = vector.load %arg5[%c0_12, %c0_13] : memref<1x16xf32, #tpu.memory_space<vmem>>, vector<1x16xf32>
      %14 = vector.broadcast %13 : vector<1x16xf32> to vector<8x16xf32>
      %15 = arith.addf %12, %14 : vector<8x16xf32>
      %c0_14 = arith.constant 0 : index
      %c0_15 = arith.constant 0 : index
      %16 = vector.load %arg6[%c0_14, %c0_15] : memref<8x16xf32, #tpu.memory_space<vmem>>, vector<8x16xf32>
      tpu.vector_store %arg6[%c0_14, %c0_15], %15 {strides = array<i32>} : memref<8x16xf32, #tpu.memory_space<vmem>>, vector<8x16xf32>,
    } else {
    }
    return
  }
  func.func @transform_0(%arg0: i32, %arg1: i32, %arg2: i32) -> (i32, i32) {
    %c0_i32 = arith.constant 0 : i32
    return %arg0, %arg2 : i32, i32
  }
  func.func @transform_1(%arg0: i32, %arg1: i32, %arg2: i32) -> (i32, i32) {
    %c0_i32 = arith.constant 0 : i32
    return %arg2, %arg1 : i32, i32
  }
  func.func @transform_2(%arg0: i32, %arg1: i32, %arg2: i32) -> (i32, i32) {
    %c0_i32 = arith.constant 0 : i32
    %c0_i32_0 = arith.constant 0 : i32
    return %c0_i32, %arg1 : i32, i32
  }
  func.func @transform_3(%arg0: i32, %arg1: i32, %arg2: i32) -> (i32, i32) {
    %c0_i32 = arith.constant 0 : i32
    return %arg0, %arg1 : i32, i32
  }
}

</mosaic_0001>

<llo_original>
// kernel: tpu_custom_call.1
$region0: #{tpu_custom_call.1}
  #allocation0 [shape = 'u32[]', space=smem, size = 0x4, offset = 0x4, fixed_abs, tag = 'smem constant byte address 0x4 - core index']
  #allocation1 [shape = 'u32[144,128]{1,0:T(1,128)}', space=vmem, size = 0x12000, scoped, tag = 'internal scratch']
  #allocation2 [shape = 'f32[8,16]{1,0:T(8,128)}', space=vmem, size = 0x1000, scoped, tag = 'scratch operand']
  %s0 = inlined_call_operand.vmem [shape: bf16[8,32], index: 0, kind: input, shape index: {}]
  %s1 = inlined_call_operand.vmem [shape: bf16[32,16], index: 1, kind: input, shape index: {}]
  %s2 = inlined_call_operand.vmem [shape: f32[1,16], index: 2, kind: input, shape index: {}]
  %s3 = inlined_call_operand.hbm [shape: f32[8,16], index: 3, kind: output, shape index: {}]
  %s4 = sld [smem:[#allocation0]]
  $region30: #{tpu_custom_call.1} parent=0
    _
  %s6 = ssub.s32 1, %s4
  %s7 = scalar_select 0, %s6, %s4
  $region1: #{tpu_custom_call.1} parent=0
    #allocation3 [shape = 'u8[4096]{0}', space=vmem, size = 0x1000, scoped, tag = 'output window, operand 0, single buffered']
    #allocation4 [shape = 's32[1]{0}', space=sflag, size = 0x4, scoped, tag = 'scoped memory for tpu_custom_call.1']
    %8 = vsyncpa [#allocation4], 0
    // Predicated region
    $region2: #{tpu_custom_call.1} parent=1 // pred_check
      _
    $region3: #{tpu_custom_call.1} parent=1 // pred_check_branch
      %10 = sbr.rel (0) target = $region5
    $region4: #{tpu_custom_call.1} parent=1 // pred_region
      _
    $region5: #{tpu_custom_call.1} parent=1 // pred_fallthru
      _
    // Predicated region
    $region6: #{tpu_custom_call.1} parent=1 // pred_check
      _
    $region7: #{tpu_custom_call.1} parent=1 // pred_check_branch
      %12 = sbr.rel (0) target = $region9
    $region8: #{tpu_custom_call.1} parent=1 // pred_region
      _
    $region9: #{tpu_custom_call.1} parent=1 // pred_fallthru
      _
    // Predicated region
    $region10: #{tpu_custom_call.1} parent=1 // pred_check
      _
    $region11: #{tpu_custom_call.1} parent=1 // pred_check_branch
      %14 = sbr.rel (0) target = $region13
    $region12: #{tpu_custom_call.1} parent=1 // pred_region
      _
    $region13: #{tpu_custom_call.1} parent=1 // pred_fallthru
      _
    %p16 = scmp.eq.s32.totalorder 0, 0
    // Predicated region
    $region14: #{tpu_custom_call.1} parent=1 // pred_check
      %p17 = pneg %p16
    $region15: #{tpu_custom_call.1} parent=1 // pred_check_branch
      %19 = sbr.rel (%p17) target = $region17
    $region16: #{tpu_custom_call.1} parent=1 // pred_region
      %vm20 = vcmask 130048
      %21 = vst.msk [vmem:[#allocation2] sm:$0xff] %vm20, 0.0
    $region17: #{tpu_custom_call.1} parent=1 // pred_fallthru
      _
    %v22 = vld [vmem:[#allocation2] sm:$0xff]
    %v23 = vld [vmem:[%s0] sm:$0xf]
    %v24 = vld [vmem:[%s1] sm:$0xf]
    %v25 = vld [vmem:[%s1 + $0x4] sm:$0xf]
    %v26 = vld [vmem:[%s1 + $0x8] sm:$0xf]
    %v27 = vld [vmem:[%s1 + $0xc] sm:$0xf]
    %v32 = vunpack.c.l.b16 %v24
    %v33 = vunpack.c.l.b16 %v25
    %v34 = vunpack.c.l.b16 %v26
    %v35 = vunpack.c.l.b16 %v27
    %v36 = vpack.c.b16 %v33, %v32
    %v37 = vpack.c.b16 %v35, %v34
    %vm40 = vcmask 261120
    %v42 = vsel %vm40, %v23, 0
    %44 = vmatprep.subr.bf16.mxu0 0
    %45 = vmatpush1.bf16.msra.mxu0 %v36
    %46 = vmatprep.subr.bf16.mxu0 0
    %47 = vmatpush1.bf16.msra.mxu0 %v37
    %48 = vmatprep.subr.bf16.mxu0 0
    %49 = vmatpush1.bf16.msra.mxu0 0
    %50 = vmatprep.subr.bf16.mxu0 0
    %51 = vmatpush1.bf16.msra.mxu0 0
    %52 = vmatprep.subr.bf16.mxu0 0
    %53 = vmatpush1.bf16.msra.mxu0 0
    %54 = vmatprep.subr.bf16.mxu0 0
    %55 = vmatpush1.bf16.msra.mxu0 0
    %56 = vmatprep.subr.bf16.mxu0 0
    %57 = vmatpush1.bf16.msra.mxu0 0
    %58 = vmatprep.subr.bf16.mxu0 0
    %59 = vmatpush1.bf16.msra.mxu0 0
    %60 = vmatprep.subr.bf16.mxu0 0
    %61 = vmatpush1.bf16.msra.mxu0 0
    %62 = vmatprep.subr.bf16.mxu0 0
    %63 = vmatpush1.bf16.msra.mxu0 0
    %64 = vmatprep.subr.bf16.mxu0 0
    %65 = vmatpush1.bf16.msra.mxu0 0
    %66 = vmatprep.subr.bf16.mxu0 0
    %67 = vmatpush1.bf16.msra.mxu0 0
    %68 = vmatprep.subr.bf16.mxu0 0
    %69 = vmatpush1.bf16.msra.mxu0 0
    %70 = vmatprep.subr.bf16.mxu0 0
    %71 = vmatpush1.bf16.msra.mxu0 0
    %72 = vmatprep.subr.bf16.mxu0 0
    %73 = vmatpush1.bf16.msra.mxu0 0
    %74 = vmatprep.subr.bf16.mxu0 0
    %75 = vmatpush1.bf16.msra.mxu0 0
    %76 = vmatprep.mubr.bf16.mxu0 0
    %77 = vmatmul.mubr.bf16.gmra.mrb[0].mxu0 %v42
    %v78 = vpop.f32.mrb[0].mxu0
    %v79 = vadd.f32 0.0, %v78
    %v80 = vpop.f32.mrb[0].mxu0
    %v81 = vpop.f32.mrb[0].mxu0
    %v82 = vpop.f32.mrb[0].mxu0
    %83 = vdwg.mxu0
    %v84 = vadd.f32 %v22, %v79
    %vm85 = vcmask 130048
    %86 = vst.msk [vmem:[#allocation2] sm:$0xff] %vm85, %v84
    // Predicated region
    $region18: #{tpu_custom_call.1} parent=1 // pred_check
      %p87 = pneg %p16
    $region19: #{tpu_custom_call.1} parent=1 // pred_check_branch
      %89 = sbr.rel (%p87) target = $region21
    $region20: #{tpu_custom_call.1} parent=1 // pred_region
      %v90 = vld [vmem:[#allocation2] sm:$0xff]
      %v91 = vld [vmem:[%s2] sm:$0x1]
      %v93 = vlaneseq
      %v94 = vshrl.u32 %v93, 7
      %v95 = vsub.s32 0, %v94
      %v96 = vrot.slane %v91, %v95
      %v98 = vadd.f32 %v90, %v96
      %99 = vst.msk [vmem:[#allocation3] sm:$0xff] %vm85, %v98
    $region21: #{tpu_custom_call.1} parent=1 // pred_fallthru
      _
    // Predicated region
    $region22: #{tpu_custom_call.1} parent=1 // pred_check
      _
    $region23: #{tpu_custom_call.1} parent=1 // pred_check_branch
      %101 = sbr.rel (0) target = $region25
    $region24: #{tpu_custom_call.1} parent=1 // pred_region
      %s103 = ssub.s32 128, 128
      %104 = vsyncadd [#allocation4], %s103
      %s106 = sshll.u32 [#allocation3], 4
      %s107 = int_to_ptr.vmem [resolvable:$true] %s106
      %109 = dma.vmem_to_hbm [thread:$0]  %s107, 128, %s3, [#allocation4]
    $region25: #{tpu_custom_call.1} parent=1 // pred_fallthru
      _
    // Predicated region
    $region26: #{tpu_custom_call.1} parent=1 // pred_check
      _
    $region27: #{tpu_custom_call.1} parent=1 // pred_check_branch
      %111 = sbr.rel (0) target = $region29
    $region28: #{tpu_custom_call.1} parent=1 // pred_region
      %112 = dma.done [#allocation4], 128
    $region29: #{tpu_custom_call.1} parent=1 // pred_fallthru
      _
    %113 = vsyncpa [#allocation4], 1

</llo_original>
